<compile_context>
chip_gen: v7x
topology: tpu7x:2x2x1
jax: 0.10.0
libtpu: 0.0.40
codegen_flags: <defaults>
</compile_context>

<pallas_src>
import jax
import jax.numpy as jnp
from jax.experimental import pallas as pl
from jax.experimental.pallas import tpu as pltpu


def _lstm_kernel(x_ref, wblk_ref, p_ref, out_ref):
    """One B-tile of independent sequences: full recurrence + final linear.

    x_ref:    (Bt, S*I)     flattened input sequences for this batch tile
    wblk_ref: (S*I, S*4H)   block-diagonal input->gate weights (W_ih^T per step)
    p_ref:    (H+3, 4H)     param slab: rows [0:H]=W_hh^T, [H]=b_ih+b_hh,
                            [H+1]=w_lin (lanes 0:H), [H+2]=b_lin (lane 0)
    out_ref:  (Bt, 1)       prediction for the LAST timestep of each sequence
    """
    four_h = p_ref.shape[1]
    hidden = four_h // 4
    seq_len = wblk_ref.shape[1] // four_h
    b_tile = x_ref.shape[0]

    whh = p_ref[0:hidden, :]                 # (H, 4H), loop-invariant MXU RHS
    bias = p_ref[hidden:hidden + 1, :]       # (1, 4H)

    # --- Hoisted input projection: ONE (Bt, S*I) @ (S*I, S*4H) MXU pass. ---
    xg = jnp.dot(x_ref[...], wblk_ref[...],
                 preferred_element_type=jnp.float32)            # (Bt, S*4H)
    # Pre-add bias off the serial h-chain; slices are vreg-aligned (t*128).
    xgb = [xg[:, t * four_h:(t + 1) * four_h] + bias for t in range(seq_len)]

    h = jnp.zeros((b_tile, hidden), jnp.float32)
    c = jnp.zeros((b_tile, hidden), jnp.float32)

    # --- Fully unrolled recurrence (seq_len is a compile-time constant). ---
    for t in range(seq_len):
        gates = xgb[t] + jnp.dot(h, whh,
                                 preferred_element_type=jnp.float32)  # (Bt, 4H)
        # Full-vreg EUP passes, then lane slices (gate order [i, f, g, o]).
        sg = jax.nn.sigmoid(gates)
        tg = jnp.tanh(gates)
        i_g = sg[:, 0 * hidden:1 * hidden]
        f_g = sg[:, 1 * hidden:2 * hidden]
        g_g = tg[:, 2 * hidden:3 * hidden]
        o_g = sg[:, 3 * hidden:4 * hidden]
        c = f_g * c + i_g * g_g
        h = o_g * jnp.tanh(c)

    # --- Final linear on VPU + lane reduce (no third MXU dispatch). ---
    wlin = p_ref[hidden + 1:hidden + 2, 0:hidden]                # (1, H)
    blin = p_ref[hidden + 2:hidden + 3, 0:1]                     # (1, 1)
    out_ref[...] = jnp.sum(h * wlin, axis=-1, keepdims=True) + blin


def prep_lstm_params(w_ih, w_hh, b_ih, b_hh, w_lin, b_lin, seq_len):
    """One-time parameter packing (outside the hot path).

    Returns:
      wblk: (S*I, S*4H)  block-diagonal input->gate weights
      slab: (H+3, 4H)    consolidated recurrent/output parameters
    """
    four_h, input_size = w_ih.shape
    hidden = four_h // 4
    out_size = w_lin.shape[0]
    assert out_size == 1, "kernel packs the linear head for output_size == 1"

    wih_t = jnp.asarray(w_ih, jnp.float32).T                     # (I, 4H)
    wblk = jnp.zeros((seq_len * input_size, seq_len * four_h), jnp.float32)
    for t in range(seq_len):
        wblk = wblk.at[t * input_size:(t + 1) * input_size,
                       t * four_h:(t + 1) * four_h].set(wih_t)

    slab = jnp.zeros((hidden + 3, four_h), jnp.float32)
    slab = slab.at[0:hidden, :].set(jnp.asarray(w_hh, jnp.float32).T)
    slab = slab.at[hidden, :].set(jnp.asarray(b_ih + b_hh, jnp.float32))
    slab = slab.at[hidden + 1, 0:hidden].set(jnp.asarray(w_lin, jnp.float32)[0])
    slab = slab.at[hidden + 2, 0].set(jnp.asarray(b_lin, jnp.float32)[0])
    return wblk, slab


def lstm_forward_batched(x_batched, wblk, slab, *, b_tile=128):
    """Batched forward over B independent sequences.

    x_batched: (B, S, I) float32.  Returns (B, 1) last-step predictions.
    """
    B, S, I = x_batched.shape
    four_h = slab.shape[1]
    b_tile = min(b_tile, B)
    assert B % b_tile == 0, "pad the batch to a multiple of b_tile"

    x2 = x_batched.reshape(B, S * I).astype(jnp.float32)  # metadata-only reshape

    return pl.pallas_call(
        _lstm_kernel,
        out_shape=jax.ShapeDtypeStruct((B, 1), jnp.float32),
        grid=(B // b_tile,),
        in_specs=[
            pl.BlockSpec((b_tile, S * I), lambda i: (i, 0)),
            pl.BlockSpec((S * I, S * four_h), lambda i: (0, 0)),
            pl.BlockSpec(slab.shape, lambda i: (0, 0)),
        ],
        out_specs=pl.BlockSpec((b_tile, 1), lambda i: (i, 0)),
        compiler_params=pltpu.CompilerParams(
            dimension_semantics=("parallel",)),   # v7x: split B-tiles across TCs
    )(x2, wblk, slab)


def lstm_forward(x, wblk, slab):
    """Module-equivalent forward: x (seq_len, input_size) -> predictions[-1], shape (1,)."""
    out = lstm_forward_batched(x[None], wblk, slab, b_tile=1)
    return out[0]


def lstm_reference(x, w_ih, w_hh, b_ih, b_hh, w_lin, b_lin):
    """Pure-JAX reference of the PyTorch forward, for correctness check."""
    hidden = w_hh.shape[1]
    h = jnp.zeros((1, hidden), jnp.float32)
    c = jnp.zeros((1, hidden), jnp.float32)
    for t in range(x.shape[0]):
        x_t = x[t:t + 1]
        gates = x_t @ w_ih.T + b_ih + h @ w_hh.T + b_hh
        i_g = jax.nn.sigmoid(gates[:, 0 * hidden:1 * hidden])
        f_g = jax.nn.sigmoid(gates[:, 1 * hidden:2 * hidden])
        g_g = jnp.tanh(gates[:, 2 * hidden:3 * hidden])
        o_g = jax.nn.sigmoid(gates[:, 3 * hidden:4 * hidden])
        c = f_g * c + i_g * g_g
        h = o_g * jnp.tanh(c)
    pred = h @ w_lin.T + b_lin
    return pred[0]


if __name__ == "__main__":
    seq_len = 8
    input_size = 4
    hidden = 32
    output_size = 1

    key = jax.random.PRNGKey(0)
    ks = jax.random.split(key, 8)
    bound = 1.0 / jnp.sqrt(hidden)

    x = jax.random.normal(ks[0], (seq_len, input_size), jnp.float32)
    w_ih = jax.random.uniform(ks[1], (4 * hidden, input_size), jnp.float32, -bound, bound)
    w_hh = jax.random.uniform(ks[2], (4 * hidden, hidden), jnp.float32, -bound, bound)
    b_ih = jax.random.uniform(ks[3], (4 * hidden,), jnp.float32, -bound, bound)
    b_hh = jax.random.uniform(ks[4], (4 * hidden,), jnp.float32, -bound, bound)
    w_lin = jax.random.uniform(ks[5], (output_size, hidden), jnp.float32, -bound, bound)
    b_lin = jax.random.uniform(ks[6], (output_size,), jnp.float32, -bound, bound)

    # One-time parameter packing (outside the hot path).
    wblk, slab = prep_lstm_params(w_ih, w_hh, b_ih, b_hh, w_lin, b_lin, seq_len)

    # --- Module-equivalent path (B = 1), matches LSTM.forward semantics. ---
    out = lstm_forward(x, wblk, slab)
    jax.block_until_ready(out)
    ref = lstm_reference(x, w_ih, w_hh, b_ih, b_hh, w_lin, b_lin)
    assert out.shape == (output_size,)
    assert jnp.allclose(out, ref, atol=1e-5, rtol=1e-5), (out, ref)

    # --- Batched path: 16 independent sequences, grid of 2 B-tiles of 8. ---
    B = 16
    xb = jax.random.normal(ks[7], (B, seq_len, input_size), jnp.float32)
    outb = lstm_forward_batched(xb, wblk, slab, b_tile=8)
    jax.block_until_ready(outb)
    refb = jnp.stack([lstm_reference(xb[b], w_ih, w_hh, b_ih, b_hh, w_lin, b_lin)
                      for b in range(B)])
    assert outb.shape == (B, output_size)
    assert jnp.allclose(outb, refb, atol=1e-5, rtol=1e-5), (outb, refb)

    print("KERNEL_OK")
</pallas_src>

<mosaic_0001>
module attributes {stable_mosaic.version = 11 : i64} {
  func.func @_lstm_kernel(%arg0: i32, %arg1: memref<1x32xf32, #tpu.memory_space<vmem>>, %arg2: memref<32x1024xf32, #tpu.memory_space<vmem>>, %arg3: memref<35x128xf32, #tpu.memory_space<vmem>>, %arg4: memref<1x1xf32, #tpu.memory_space<vmem>>) attributes {dimension_semantics = [#tpu.dimension_semantics<parallel>], iteration_bounds = array<i64: 1>, scalar_prefetch = 0 : i64, scratch_operands = 0 : i64, tpu.core_type = #tpu.core_type<tc>, window_params = [{transform_indices = @transform_0, window_bounds = array<i64: 1, 32>}, {pipeline_mode = #tpu.pipeline_mode<synchronous>, transform_indices = @transform_1, window_bounds = array<i64: 32, 1024>}, {pipeline_mode = #tpu.pipeline_mode<synchronous>, transform_indices = @transform_2, window_bounds = array<i64: 35, 128>}, {transform_indices = @transform_3, window_bounds = array<i64: 1, 1>}]} {
    %c0 = arith.constant 0 : index
    %c0_0 = arith.constant 0 : index
    %0 = vector.load %arg3[%c0, %c0_0] : memref<35x128xf32, #tpu.memory_space<vmem>>, vector<32x128xf32>
    %c32 = arith.constant 32 : index
    %c0_1 = arith.constant 0 : index
    %1 = vector.load %arg3[%c32, %c0_1] : memref<35x128xf32, #tpu.memory_space<vmem>>, vector<1x128xf32>
    %c0_2 = arith.constant 0 : index
    %c0_3 = arith.constant 0 : index
    %2 = vector.load %arg1[%c0_2, %c0_3] : memref<1x32xf32, #tpu.memory_space<vmem>>, vector<1x32xf32>
    %c0_4 = arith.constant 0 : index
    %c0_5 = arith.constant 0 : index
    %3 = vector.load %arg2[%c0_4, %c0_5] : memref<32x1024xf32, #tpu.memory_space<vmem>>, vector<32x1024xf32>
    %cst = arith.constant dense<0.000000e+00> : vector<1x1024xf32>
    %4 = tpu.matmul %2, %3, %cst {dimension_numbers = #tpu.dot_dimension_numbers<[1], [0], [0], [1], [0, 0, 1, 1], [], []>} : vector<1x32xf32>, vector<32x1024xf32>, vector<1x1024xf32> -> vector<1x1024xf32>
    %5 = vector.extract_strided_slice %4 {offsets = [0, 0], sizes = [1, 128], strides = [1, 1]} : vector<1x1024xf32> to vector<1x128xf32>
    %6 = arith.addf %5, %1 : vector<1x128xf32>
    %7 = vector.extract_strided_slice %4 {offsets = [0, 128], sizes = [1, 128], strides = [1, 1]} : vector<1x1024xf32> to vector<1x128xf32>
    %8 = arith.addf %7, %1 : vector<1x128xf32>
    %9 = vector.extract_strided_slice %4 {offsets = [0, 256], sizes = [1, 128], strides = [1, 1]} : vector<1x1024xf32> to vector<1x128xf32>
    %10 = arith.addf %9, %1 : vector<1x128xf32>
    %11 = vector.extract_strided_slice %4 {offsets = [0, 384], sizes = [1, 128], strides = [1, 1]} : vector<1x1024xf32> to vector<1x128xf32>
    %12 = arith.addf %11, %1 : vector<1x128xf32>
    %13 = vector.extract_strided_slice %4 {offsets = [0, 512], sizes = [1, 128], strides = [1, 1]} : vector<1x1024xf32> to vector<1x128xf32>
    %14 = arith.addf %13, %1 : vector<1x128xf32>
    %15 = vector.extract_strided_slice %4 {offsets = [0, 640], sizes = [1, 128], strides = [1, 1]} : vector<1x1024xf32> to vector<1x128xf32>
    %16 = arith.addf %15, %1 : vector<1x128xf32>
    %17 = vector.extract_strided_slice %4 {offsets = [0, 768], sizes = [1, 128], strides = [1, 1]} : vector<1x1024xf32> to vector<1x128xf32>
    %18 = arith.addf %17, %1 : vector<1x128xf32>
    %19 = vector.extract_strided_slice %4 {offsets = [0, 896], sizes = [1, 128], strides = [1, 1]} : vector<1x1024xf32> to vector<1x128xf32>
    %20 = arith.addf %19, %1 : vector<1x128xf32>
    %cst_6 = arith.constant 0.000000e+00 : f32
    %21 = vector.broadcast %cst_6 : f32 to vector<1x32xf32>
    %cst_7 = arith.constant 0.000000e+00 : f32
    %22 = vector.broadcast %cst_7 : f32 to vector<1x32xf32>
    %cst_8 = arith.constant dense<0.000000e+00> : vector<1x128xf32>
    %23 = tpu.matmul %21, %0, %cst_8 {dimension_numbers = #tpu.dot_dimension_numbers<[1], [0], [0], [1], [0, 0, 1, 1], [], []>} : vector<1x32xf32>, vector<32x128xf32>, vector<1x128xf32> -> vector<1x128xf32>
    %24 = arith.addf %6, %23 : vector<1x128xf32>
    %25 = arith.negf %24 : vector<1x128xf32>
    %26 = math.exp %25 : vector<1x128xf32>
    %cst_9 = arith.constant 1.000000e+00 : f32
    %27 = vector.broadcast %cst_9 : f32 to vector<1x128xf32>
    %28 = arith.addf %27, %26 : vector<1x128xf32>
    %29 = arith.divf %27, %28 : vector<1x128xf32>
    %30 = math.tanh %24 : vector<1x128xf32>
    %31 = vector.extract_strided_slice %29 {offsets = [0, 0], sizes = [1, 32], strides = [1, 1]} : vector<1x128xf32> to vector<1x32xf32>
    %32 = vector.extract_strided_slice %29 {offsets = [0, 32], sizes = [1, 32], strides = [1, 1]} : vector<1x128xf32> to vector<1x32xf32>
    %33 = vector.extract_strided_slice %30 {offsets = [0, 64], sizes = [1, 32], strides = [1, 1]} : vector<1x128xf32> to vector<1x32xf32>
    %34 = vector.extract_strided_slice %29 {offsets = [0, 96], sizes = [1, 32], strides = [1, 1]} : vector<1x128xf32> to vector<1x32xf32>
    %35 = arith.mulf %32, %22 : vector<1x32xf32>
    %36 = arith.mulf %31, %33 : vector<1x32xf32>
    %37 = arith.addf %35, %36 : vector<1x32xf32>
    %38 = math.tanh %37 : vector<1x32xf32>
    %39 = arith.mulf %34, %38 : vector<1x32xf32>
    %cst_10 = arith.constant dense<0.000000e+00> : vector<1x128xf32>
    %40 = tpu.matmul %39, %0, %cst_10 {dimension_numbers = #tpu.dot_dimension_numbers<[1], [0], [0], [1], [0, 0, 1, 1], [], []>} : vector<1x32xf32>, vector<32x128xf32>, vector<1x128xf32> -> vector<1x128xf32>
    %41 = arith.addf %8, %40 : vector<1x128xf32>
    %42 = arith.negf %41 : vector<1x128xf32>
    %43 = math.exp %42 : vector<1x128xf32>
    %cst_11 = arith.constant 1.000000e+00 : f32
    %44 = vector.broadcast %cst_11 : f32 to vector<1x128xf32>
    %45 = arith.addf %44, %43 : vector<1x128xf32>
    %46 = arith.divf %44, %45 : vector<1x128xf32>
    %47 = math.tanh %41 : vector<1x128xf32>
    %48 = vector.extract_strided_slice %46 {offsets = [0, 0], sizes = [1, 32], strides = [1, 1]} : vector<1x128xf32> to vector<1x32xf32>
    %49 = vector.extract_strided_slice %46 {offsets = [0, 32], sizes = [1, 32], strides = [1, 1]} : vector<1x128xf32> to vector<1x32xf32>
    %50 = vector.extract_strided_slice %47 {offsets = [0, 64], sizes = [1, 32], strides = [1, 1]} : vector<1x128xf32> to vector<1x32xf32>
    %51 = vector.extract_strided_slice %46 {offsets = [0, 96], sizes = [1, 32], strides = [1, 1]} : vector<1x128xf32> to vector<1x32xf32>
    %52 = arith.mulf %49, %37 : vector<1x32xf32>
    %53 = arith.mulf %48, %50 : vector<1x32xf32>
    %54 = arith.addf %52, %53 : vector<1x32xf32>
    %55 = math.tanh %54 : vector<1x32xf32>
    %56 = arith.mulf %51, %55 : vector<1x32xf32>
    %cst_12 = arith.constant dense<0.000000e+00> : vector<1x128xf32>
    %57 = tpu.matmul %56, %0, %cst_12 {dimension_numbers = #tpu.dot_dimension_numbers<[1], [0], [0], [1], [0, 0, 1, 1], [], []>} : vector<1x32xf32>, vector<32x128xf32>, vector<1x128xf32> -> vector<1x128xf32>
    %58 = arith.addf %10, %57 : vector<1x128xf32>
    %59 = arith.negf %58 : vector<1x128xf32>
    %60 = math.exp %59 : vector<1x128xf32>
    %cst_13 = arith.constant 1.000000e+00 : f32
    %61 = vector.broadcast %cst_13 : f32 to vector<1x128xf32>
    %62 = arith.addf %61, %60 : vector<1x128xf32>
    %63 = arith.divf %61, %62 : vector<1x128xf32>
    %64 = math.tanh %58 : vector<1x128xf32>
    %65 = vector.extract_strided_slice %63 {offsets = [0, 0], sizes = [1, 32], strides = [1, 1]} : vector<1x128xf32> to vector<1x32xf32>
    %66 = vector.extract_strided_slice %63 {offsets = [0, 32], sizes = [1, 32], strides = [1, 1]} : vector<1x128xf32> to vector<1x32xf32>
    %67 = vector.extract_strided_slice %64 {offsets = [0, 64], sizes = [1, 32], strides = [1, 1]} : vector<1x128xf32> to vector<1x32xf32>
    %68 = vector.extract_strided_slice %63 {offsets = [0, 96], sizes = [1, 32], strides = [1, 1]} : vector<1x128xf32> to vector<1x32xf32>
    %69 = arith.mulf %66, %54 : vector<1x32xf32>
    %70 = arith.mulf %65, %67 : vector<1x32xf32>
    %71 = arith.addf %69, %70 : vector<1x32xf32>
    %72 = math.tanh %71 : vector<1x32xf32>
    %73 = arith.mulf %68, %72 : vector<1x32xf32>
    %cst_14 = arith.constant dense<0.000000e+00> : vector<1x128xf32>
    %74 = tpu.matmul %73, %0, %cst_14 {dimension_numbers = #tpu.dot_dimension_numbers<[1], [0], [0], [1], [0, 0, 1, 1], [], []>} : vector<1x32xf32>, vector<32x128xf32>, vector<1x128xf32> -> vector<1x128xf32>
    %75 = arith.addf %12, %74 : vector<1x128xf32>
    %76 = arith.negf %75 : vector<1x128xf32>
    %77 = math.exp %76 : vector<1x128xf32>
    %cst_15 = arith.constant 1.000000e+00 : f32
    %78 = vector.broadcast %cst_15 : f32 to vector<1x128xf32>
    %79 = arith.addf %78, %77 : vector<1x128xf32>
    %80 = arith.divf %78, %79 : vector<1x128xf32>
    %81 = math.tanh %75 : vector<1x128xf32>
    %82 = vector.extract_strided_slice %80 {offsets = [0, 0], sizes = [1, 32], strides = [1, 1]} : vector<1x128xf32> to vector<1x32xf32>
    %83 = vector.extract_strided_slice %80 {offsets = [0, 32], sizes = [1, 32], strides = [1, 1]} : vector<1x128xf32> to vector<1x32xf32>
    %84 = vector.extract_strided_slice %81 {offsets = [0, 64], sizes = [1, 32], strides = [1, 1]} : vector<1x128xf32> to vector<1x32xf32>
    %85 = vector.extract_strided_slice %80 {offsets = [0, 96], sizes = [1, 32], strides = [1, 1]} : vector<1x128xf32> to vector<1x32xf32>
    %86 = arith.mulf %83, %71 : vector<1x32xf32>
    %87 = arith.mulf %82, %84 : vector<1x32xf32>
    %88 = arith.addf %86, %87 : vector<1x32xf32>
    %89 = math.tanh %88 : vector<1x32xf32>
    %90 = arith.mulf %85, %89 : vector<1x32xf32>
    %cst_16 = arith.constant dense<0.000000e+00> : vector<1x128xf32>
    %91 = tpu.matmul %90, %0, %cst_16 {dimension_numbers = #tpu.dot_dimension_numbers<[1], [0], [0], [1], [0, 0, 1, 1], [], []>} : vector<1x32xf32>, vector<32x128xf32>, vector<1x128xf32> -> vector<1x128xf32>
    %92 = arith.addf %14, %91 : vector<1x128xf32>
    %93 = arith.negf %92 : vector<1x128xf32>
    %94 = math.exp %93 : vector<1x128xf32>
    %cst_17 = arith.constant 1.000000e+00 : f32
    %95 = vector.broadcast %cst_17 : f32 to vector<1x128xf32>
    %96 = arith.addf %95, %94 : vector<1x128xf32>
    %97 = arith.divf %95, %96 : vector<1x128xf32>
    %98 = math.tanh %92 : vector<1x128xf32>
    %99 = vector.extract_strided_slice %97 {offsets = [0, 0], sizes = [1, 32], strides = [1, 1]} : vector<1x128xf32> to vector<1x32xf32>
    %100 = vector.extract_strided_slice %97 {offsets = [0, 32], sizes = [1, 32], strides = [1, 1]} : vector<1x128xf32> to vector<1x32xf32>
    %101 = vector.extract_strided_slice %98 {offsets = [0, 64], sizes = [1, 32], strides = [1, 1]} : vector<1x128xf32> to vector<1x32xf32>
    %102 = vector.extract_strided_slice %97 {offsets = [0, 96], sizes = [1, 32], strides = [1, 1]} : vector<1x128xf32> to vector<1x32xf32>
    %103 = arith.mulf %100, %88 : vector<1x32xf32>
    %104 = arith.mulf %99, %101 : vector<1x32xf32>
    %105 = arith.addf %103, %104 : vector<1x32xf32>
    %106 = math.tanh %105 : vector<1x32xf32>
    %107 = arith.mulf %102, %106 : vector<1x32xf32>
    %cst_18 = arith.constant dense<0.000000e+00> : vector<1x128xf32>
    %108 = tpu.matmul %107, %0, %cst_18 {dimension_numbers = #tpu.dot_dimension_numbers<[1], [0], [0], [1], [0, 0, 1, 1], [], []>} : vector<1x32xf32>, vector<32x128xf32>, vector<1x128xf32> -> vector<1x128xf32>
    %109 = arith.addf %16, %108 : vector<1x128xf32>
    %110 = arith.negf %109 : vector<1x128xf32>
    %111 = math.exp %110 : vector<1x128xf32>
    %cst_19 = arith.constant 1.000000e+00 : f32
    %112 = vector.broadcast %cst_19 : f32 to vector<1x128xf32>
    %113 = arith.addf %112, %111 : vector<1x128xf32>
    %114 = arith.divf %112, %113 : vector<1x128xf32>
    %115 = math.tanh %109 : vector<1x128xf32>
    %116 = vector.extract_strided_slice %114 {offsets = [0, 0], sizes = [1, 32], strides = [1, 1]} : vector<1x128xf32> to vector<1x32xf32>
    %117 = vector.extract_strided_slice %114 {offsets = [0, 32], sizes = [1, 32], strides = [1, 1]} : vector<1x128xf32> to vector<1x32xf32>
    %118 = vector.extract_strided_slice %115 {offsets = [0, 64], sizes = [1, 32], strides = [1, 1]} : vector<1x128xf32> to vector<1x32xf32>
    %119 = vector.extract_strided_slice %114 {offsets = [0, 96], sizes = [1, 32], strides = [1, 1]} : vector<1x128xf32> to vector<1x32xf32>
    %120 = arith.mulf %117, %105 : vector<1x32xf32>
    %121 = arith.mulf %116, %118 : vector<1x32xf32>
    %122 = arith.addf %120, %121 : vector<1x32xf32>
    %123 = math.tanh %122 : vector<1x32xf32>
    %124 = arith.mulf %119, %123 : vector<1x32xf32>
    %cst_20 = arith.constant dense<0.000000e+00> : vector<1x128xf32>
    %125 = tpu.matmul %124, %0, %cst_20 {dimension_numbers = #tpu.dot_dimension_numbers<[1], [0], [0], [1], [0, 0, 1, 1], [], []>} : vector<1x32xf32>, vector<32x128xf32>, vector<1x128xf32> -> vector<1x128xf32>
    %126 = arith.addf %18, %125 : vector<1x128xf32>
    %127 = arith.negf %126 : vector<1x128xf32>
    %128 = math.exp %127 : vector<1x128xf32>
    %cst_21 = arith.constant 1.000000e+00 : f32
    %129 = vector.broadcast %cst_21 : f32 to vector<1x128xf32>
    %130 = arith.addf %129, %128 : vector<1x128xf32>
    %131 = arith.divf %129, %130 : vector<1x128xf32>
    %132 = math.tanh %126 : vector<1x128xf32>
    %133 = vector.extract_strided_slice %131 {offsets = [0, 0], sizes = [1, 32], strides = [1, 1]} : vector<1x128xf32> to vector<1x32xf32>
    %134 = vector.extract_strided_slice %131 {offsets = [0, 32], sizes = [1, 32], strides = [1, 1]} : vector<1x128xf32> to vector<1x32xf32>
    %135 = vector.extract_strided_slice %132 {offsets = [0, 64], sizes = [1, 32], strides = [1, 1]} : vector<1x128xf32> to vector<1x32xf32>
    %136 = vector.extract_strided_slice %131 {offsets = [0, 96], sizes = [1, 32], strides = [1, 1]} : vector<1x128xf32> to vector<1x32xf32>
    %137 = arith.mulf %134, %122 : vector<1x32xf32>
    %138 = arith.mulf %133, %135 : vector<1x32xf32>
    %139 = arith.addf %137, %138 : vector<1x32xf32>
    %140 = math.tanh %139 : vector<1x32xf32>
    %141 = arith.mulf %136, %140 : vector<1x32xf32>
    %cst_22 = arith.constant dense<0.000000e+00> : vector<1x128xf32>
    %142 = tpu.matmul %141, %0, %cst_22 {dimension_numbers = #tpu.dot_dimension_numbers<[1], [0], [0], [1], [0, 0, 1, 1], [], []>} : vector<1x32xf32>, vector<32x128xf32>, vector<1x128xf32> -> vector<1x128xf32>
    %143 = arith.addf %20, %142 : vector<1x128xf32>
    %144 = arith.negf %143 : vector<1x128xf32>
    %145 = math.exp %144 : vector<1x128xf32>
    %cst_23 = arith.constant 1.000000e+00 : f32
    %146 = vector.broadcast %cst_23 : f32 to vector<1x128xf32>
    %147 = arith.addf %146, %145 : vector<1x128xf32>
    %148 = arith.divf %146, %147 : vector<1x128xf32>
    %149 = math.tanh %143 : vector<1x128xf32>
    %150 = vector.extract_strided_slice %148 {offsets = [0, 0], sizes = [1, 32], strides = [1, 1]} : vector<1x128xf32> to vector<1x32xf32>
    %151 = vector.extract_strided_slice %148 {offsets = [0, 32], sizes = [1, 32], strides = [1, 1]} : vector<1x128xf32> to vector<1x32xf32>
    %152 = vector.extract_strided_slice %149 {offsets = [0, 64], sizes = [1, 32], strides = [1, 1]} : vector<1x128xf32> to vector<1x32xf32>
    %153 = vector.extract_strided_slice %148 {offsets = [0, 96], sizes = [1, 32], strides = [1, 1]} : vector<1x128xf32> to vector<1x32xf32>
    %154 = arith.mulf %151, %139 : vector<1x32xf32>
    %155 = arith.mulf %150, %152 : vector<1x32xf32>
    %156 = arith.addf %154, %155 : vector<1x32xf32>
    %157 = math.tanh %156 : vector<1x32xf32>
    %158 = arith.mulf %153, %157 : vector<1x32xf32>
    %c33 = arith.constant 33 : index
    %c0_24 = arith.constant 0 : index
    %159 = vector.load %arg3[%c33, %c0_24] : memref<35x128xf32, #tpu.memory_space<vmem>>, vector<1x32xf32>
    %c34 = arith.constant 34 : index
    %c0_25 = arith.constant 0 : index
    %160 = vector.load %arg3[%c34, %c0_25] : memref<35x128xf32, #tpu.memory_space<vmem>>, vector<1x1xf32>
    %161 = arith.mulf %158, %159 : vector<1x32xf32>
    %cst_26 = arith.constant dense<0.000000e+00> : vector<1xf32>
    %162 = vector.multi_reduction <add>, %161, %cst_26 [1] : vector<1x32xf32> to vector<1xf32>
    %163 = vector.shape_cast %162 : vector<1xf32> to vector<1x1xf32>
    %164 = arith.addf %163, %160 : vector<1x1xf32>
    %c0_27 = arith.constant 0 : index
    %c0_28 = arith.constant 0 : index
    %165 = vector.load %arg4[%c0_27, %c0_28] : memref<1x1xf32, #tpu.memory_space<vmem>>, vector<1x1xf32>
    tpu.vector_store %arg4[%c0_27, %c0_28], %164 {strides = array<i32>} : memref<1x1xf32, #tpu.memory_space<vmem>>, vector<1x1xf32>,
    return
  }
  func.func @transform_0(%arg0: i32) -> (i32, i32) {
    %c0_i32 = arith.constant 0 : i32
    %c0_i32_0 = arith.constant 0 : i32
    return %arg0, %c0_i32 : i32, i32
  }
  func.func @transform_1(%arg0: i32) -> (i32, i32) {
    %c0_i32 = arith.constant 0 : i32
    %c0_i32_0 = arith.constant 0 : i32
    %c0_i32_1 = arith.constant 0 : i32
    return %c0_i32, %c0_i32_0 : i32, i32
  }
  func.func @transform_2(%arg0: i32) -> (i32, i32) {
    %c0_i32 = arith.constant 0 : i32
    %c0_i32_0 = arith.constant 0 : i32
    %c0_i32_1 = arith.constant 0 : i32
    return %c0_i32, %c0_i32_0 : i32, i32
  }
  func.func @transform_3(%arg0: i32) -> (i32, i32) {
    %c0_i32 = arith.constant 0 : i32
    %c0_i32_0 = arith.constant 0 : i32
    return %arg0, %c0_i32 : i32, i32
  }
}

</mosaic_0001>

<llo_original>
// kernel: tpu_custom_call.1
$region0: #{tpu_custom_call.1}
  #allocation0 [shape = 'u32[]', space=smem, size = 0x4, offset = 0x4, fixed_abs, tag = 'smem constant byte address 0x4 - core index']
  #allocation1 [shape = 'u32[144,128]{1,0:T(1,128)}', space=vmem, size = 0x12000, scoped, tag = 'internal scratch']
  %s0 = inlined_call_operand.hbm [shape: f32[1,32], index: 0, kind: input, shape index: {}]
  %s1 = inlined_call_operand.hbm [shape: f32[32,1024], index: 1, kind: input, shape index: {}]
  %s2 = inlined_call_operand.hbm [shape: f32[35,128], index: 2, kind: input, shape index: {}]
  %s3 = inlined_call_operand.hbm [shape: f32[1,1], index: 3, kind: output, shape index: {}]
  %s4 = sld [smem:[#allocation0]]
  $region34: #{tpu_custom_call.1} parent=0
    _
  %s6 = ssub.s32 1, %s4
  %s7 = scalar_select 0, %s6, %s4
  $region1: #{tpu_custom_call.1} parent=0
    #allocation2 [shape = 'u8[512]{0}', space=vmem, size = 0x400, scoped, tag = 'input window, operand 0, single buffered']
    #allocation3 [shape = 's32[1]{0}', space=sflag, size = 0x4, scoped, tag = 'scoped memory for tpu_custom_call.1']
    #allocation4 [shape = 's32[1]{0}', space=sflag, size = 0x4, scoped, tag = 'scoped memory for tpu_custom_call.1']
    #allocation5 [shape = 'u8[131072]{0}', space=vmem, size = 0x20000, scoped, tag = 'input window, operand 1, single buffered']
    #allocation6 [shape = 's32[1]{0}', space=sflag, size = 0x4, scoped, tag = 'scoped memory for tpu_custom_call.1']
    #allocation7 [shape = 'u8[20480]{0}', space=vmem, size = 0x5000, scoped, tag = 'input window, operand 2, single buffered']
    #allocation8 [shape = 'u8[512]{0}', space=vmem, size = 0x400, scoped, tag = 'output window, operand 0, single buffered']
    %8 = vsyncpa [#allocation3], 0
    %9 = vsyncpa [#allocation6], 0
    %10 = vsyncpa [#allocation4], 0
    // Predicated region
    $region2: #{tpu_custom_call.1} parent=1 // pred_check
      _
    $region3: #{tpu_custom_call.1} parent=1 // pred_check_branch
      %12 = sbr.rel (0) target = $region5
    $region4: #{tpu_custom_call.1} parent=1 // pred_region
      %s14 = ssub.s32 16, 16
      %15 = vsyncadd [#allocation3], %s14
      %s17 = sshll.u32 [#allocation2], 4
      %s18 = int_to_ptr.vmem [resolvable:$true] %s17
      %20 = dma.hbm_to_vmem [thread:$0]  %s0, 16, %s18, [#allocation3]
    $region5: #{tpu_custom_call.1} parent=1 // pred_fallthru
      _
    // Predicated region
    $region6: #{tpu_custom_call.1} parent=1 // pred_check
      _
    $region7: #{tpu_custom_call.1} parent=1 // pred_check_branch
      %22 = sbr.rel (0) target = $region9
    $region8: #{tpu_custom_call.1} parent=1 // pred_region
      %s24 = ssub.s32 4096, 4096
      %25 = vsyncadd [#allocation6], %s24
      %s26 = sshll.u32 [#allocation5], 4
      %s27 = int_to_ptr.vmem [resolvable:$true] %s26
      %32 = dma.hbm_to_vmem [thread:$0]  %s1, 4096, %s27, [#allocation6], 1024, 1024, 64
    $region9: #{tpu_custom_call.1} parent=1 // pred_fallthru
      _
    // Predicated region
    $region10: #{tpu_custom_call.1} parent=1 // pred_check
      _
    $region11: #{tpu_custom_call.1} parent=1 // pred_check_branch
      %34 = sbr.rel (0) target = $region13
    $region12: #{tpu_custom_call.1} parent=1 // pred_region
      %s36 = ssub.s32 640, 640
      %37 = vsyncadd [#allocation6], %s36
      %s38 = sshll.u32 [#allocation7], 4
      %s39 = int_to_ptr.vmem [resolvable:$true] %s38
      %44 = dma.hbm_to_vmem [thread:$0]  %s2, 640, %s39, [#allocation6], 128, 128, 8
    $region13: #{tpu_custom_call.1} parent=1 // pred_fallthru
      _
    // Predicated region
    $region14: #{tpu_custom_call.1} parent=1 // pred_check
      _
    $region15: #{tpu_custom_call.1} parent=1 // pred_check_branch
      %46 = sbr.rel (0) target = $region17
    $region16: #{tpu_custom_call.1} parent=1 // pred_region
      %47 = dma.done [#allocation3], 16
    $region17: #{tpu_custom_call.1} parent=1 // pred_fallthru
      _
    // Predicated region
    $region18: #{tpu_custom_call.1} parent=1 // pred_check
      _
    $region19: #{tpu_custom_call.1} parent=1 // pred_check_branch
      %49 = sbr.rel (0) target = $region21
    $region20: #{tpu_custom_call.1} parent=1 // pred_region
      %50 = dma.done [#allocation6], 4096
    $region21: #{tpu_custom_call.1} parent=1 // pred_fallthru
      _
    // Predicated region
    $region22: #{tpu_custom_call.1} parent=1 // pred_check
      _
    $region23: #{tpu_custom_call.1} parent=1 // pred_check_branch
      %52 = sbr.rel (0) target = $region25
    $region24: #{tpu_custom_call.1} parent=1 // pred_region
      %53 = dma.done [#allocation6], 640
    $region25: #{tpu_custom_call.1} parent=1 // pred_fallthru
      _
    %v54 = vld [vmem:[#allocation7] sm:$0xff]
    %v55 = vld [vmem:[#allocation7 + $0x8] sm:$0xff]
    %v56 = vld [vmem:[#allocation7 + $0x10] sm:$0xff]
    %v57 = vld [vmem:[#allocation7 + $0x18] sm:$0xff]
    %v58 = vld [vmem:[#allocation7 + $0x20] sm:$0x1]
    %v59 = vld [vmem:[#allocation2] sm:$0x1]
    %v60 = vld [vmem:[#allocation5] sm:$0xff]
    %v61 = vld [vmem:[#allocation5 + $0x8] sm:$0xff]
    %v62 = vld [vmem:[#allocation5 + $0x10] sm:$0xff]
    %v63 = vld [vmem:[#allocation5 + $0x18] sm:$0xff]
    %v64 = vld [vmem:[#allocation5 + $0x20] sm:$0xff]
    %v65 = vld [vmem:[#allocation5 + $0x28] sm:$0xff]
    %v66 = vld [vmem:[#allocation5 + $0x30] sm:$0xff]
    %v67 = vld [vmem:[#allocation5 + $0x38] sm:$0xff]
    %v68 = vld [vmem:[#allocation5 + $0x40] sm:$0xff]
    %v69 = vld [vmem:[#allocation5 + $0x48] sm:$0xff]
    %v70 = vld [vmem:[#allocation5 + $0x50] sm:$0xff]
    %v71 = vld [vmem:[#allocation5 + $0x58] sm:$0xff]
    %v72 = vld [vmem:[#allocation5 + $0x60] sm:$0xff]
    %v73 = vld [vmem:[#allocation5 + $0x68] sm:$0xff]
    %v74 = vld [vmem:[#allocation5 + $0x70] sm:$0xff]
    %v75 = vld [vmem:[#allocation5 + $0x78] sm:$0xff]
    %v76 = vld [vmem:[#allocation5 + $0x80] sm:$0xff]
    %v77 = vld [vmem:[#allocation5 + $0x88] sm:$0xff]
    %v78 = vld [vmem:[#allocation5 + $0x90] sm:$0xff]
    %v79 = vld [vmem:[#allocation5 + $0x98] sm:$0xff]
    %v80 = vld [vmem:[#allocation5 + $0xa0] sm:$0xff]
    %v81 = vld [vmem:[#allocation5 + $0xa8] sm:$0xff]
    %v82 = vld [vmem:[#allocation5 + $0xb0] sm:$0xff]
    %v83 = vld [vmem:[#allocation5 + $0xb8] sm:$0xff]
    %v84 = vld [vmem:[#allocation5 + $0xc0] sm:$0xff]
    %v85 = vld [vmem:[#allocation5 + $0xc8] sm:$0xff]
    %v86 = vld [vmem:[#allocation5 + $0xd0] sm:$0xff]
    %v87 = vld [vmem:[#allocation5 + $0xd8] sm:$0xff]
    %v88 = vld [vmem:[#allocation5 + $0xe0] sm:$0xff]
    %v89 = vld [vmem:[#allocation5 + $0xe8] sm:$0xff]
    %v90 = vld [vmem:[#allocation5 + $0xf0] sm:$0xff]
    %v91 = vld [vmem:[#allocation5 + $0xf8] sm:$0xff]
    %vm92 = vcmask 261120
    %v94 = vsel %vm92, %v59, 0
    %96 = vmatprep.subr.mxu0 %v61
    %97 = vmatpush1.msra.mxu0 %v60
    %98 = vmatprep.subr.mxu0 %v69
    %99 = vmatpush1.msra.mxu0 %v68
    %100 = vmatprep.subr.mxu0 %v77
    %101 = vmatpush1.msra.mxu0 %v76
    %102 = vmatprep.subr.mxu0 %v85
    %103 = vmatpush1.msra.mxu0 %v84
    %104 = vmatprep.subr.mxu0 0.0
    %105 = vmatpush1.msra.mxu0 0.0
    %106 = vmatprep.subr.mxu0 0.0
    %107 = vmatpush1.msra.mxu0 0.0
    %108 = vmatprep.subr.mxu0 0.0
    %109 = vmatpush1.msra.mxu0 0.0
    %110 = vmatprep.subr.mxu0 0.0
    %111 = vmatpush1.msra.mxu0 0.0
    %112 = vmatprep.subr.mxu0 0.0
    %113 = vmatpush1.msra.mxu0 0.0
    %114 = vmatprep.subr.mxu0 0.0
    %115 = vmatpush1.msra.mxu0 0.0
    %116 = vmatprep.subr.mxu0 0.0
    %117 = vmatpush1.msra.mxu0 0.0
    %118 = vmatprep.subr.mxu0 0.0
    %119 = vmatpush1.msra.mxu0 0.0
    %120 = vmatprep.subr.mxu0 0.0
    %121 = vmatpush1.msra.mxu0 0.0
    %122 = vmatprep.subr.mxu0 0.0
    %123 = vmatpush1.msra.mxu0 0.0
    %124 = vmatprep.subr.mxu0 0.0
    %125 = vmatpush1.msra.mxu0 0.0
    %126 = vmatprep.subr.mxu0 0.0
    %127 = vmatpush1.msra.mxu0 0.0
    %128 = vmatprep.subr.mxu0 0.0
    %129 = vmatpush1.msra.mxu0 0.0
    %130 = vmatprep.subr.mxu0 0.0
    %131 = vmatpush1.msra.mxu0 0.0
    %132 = vmatprep.subr.mxu0 0.0
    %133 = vmatpush1.msra.mxu0 0.0
    %134 = vmatprep.subr.mxu0 0.0
    %135 = vmatpush1.msra.mxu0 0.0
    %136 = vmatprep.subr.mxu0 0.0
    %137 = vmatpush1.msra.mxu0 0.0
    %138 = vmatprep.subr.mxu0 0.0
    %139 = vmatpush1.msra.mxu0 0.0
    %140 = vmatprep.subr.mxu0 0.0
    %141 = vmatpush1.msra.mxu0 0.0
    %142 = vmatprep.subr.mxu0 0.0
    %143 = vmatpush1.msra.mxu0 0.0
    %144 = vmatprep.subr.mxu0 0.0
    %145 = vmatpush1.msra.mxu0 0.0
    %146 = vmatprep.subr.mxu0 0.0
    %147 = vmatpush1.msra.mxu0 0.0
    %148 = vmatprep.subr.mxu0 0.0
    %149 = vmatpush1.msra.mxu0 0.0
    %150 = vmatprep.subr.mxu0 0.0
    %151 = vmatpush1.msra.mxu0 0.0
    %152 = vmatprep.subr.mxu0 0.0
    %153 = vmatpush1.msra.mxu0 0.0
    %154 = vmatprep.subr.mxu0 0.0
    %155 = vmatpush1.msra.mxu0 0.0
    %156 = vmatprep.subr.mxu0 0.0
    %157 = vmatpush1.msra.mxu0 0.0
    %158 = vmatprep.subr.mxu0 0.0
    %159 = vmatpush1.msra.mxu0 0.0
    %160 = vmatprep.mubr.f32.mxu0 0.0
    %161 = vmatmul.mubr.f32.gmra.mrb[0].mxu0 %v94
    %v162 = vpop.f32.mrb[0].mxu0
    %v163 = vadd.f32 0.0, %v162
    %v164 = vpop.f32.mrb[0].mxu0
    %v165 = vadd.f32 0.0, %v164
    %166 = vdwg.mxu0
    %167 = vmatprep.subr.mxu0 %v63
    %168 = vmatpush1.msra.mxu0 %v62
    %169 = vmatprep.subr.mxu0 %v71
    %170 = vmatpush1.msra.mxu0 %v70
    %171 = vmatprep.subr.mxu0 %v79
    %172 = vmatpush1.msra.mxu0 %v78
    %173 = vmatprep.subr.mxu0 %v87
    %174 = vmatpush1.msra.mxu0 %v86
    %175 = vmatprep.subr.mxu0 0.0
    %176 = vmatpush1.msra.mxu0 0.0
    %177 = vmatprep.subr.mxu0 0.0
    %178 = vmatpush1.msra.mxu0 0.0
    %179 = vmatprep.subr.mxu0 0.0
    %180 = vmatpush1.msra.mxu0 0.0
    %181 = vmatprep.subr.mxu0 0.0
    %182 = vmatpush1.msra.mxu0 0.0
    %183 = vmatprep.subr.mxu0 0.0
    %184 = vmatpush1.msra.mxu0 0.0
    %185 = vmatprep.subr.mxu0 0.0
    %186 = vmatpush1.msra.mxu0 0.0
    %187 = vmatprep.subr.mxu0 0.0
    %188 = vmatpush1.msra.mxu0 0.0
    %189 = vmatprep.subr.mxu0 0.0
    %190 = vmatpush1.msra.mxu0 0.0
    %191 = vmatprep.subr.mxu0 0.0
    %192 = vmatpush1.msra.mxu0 0.0
    %193 = vmatprep.subr.mxu0 0.0
    %194 = vmatpush1.msra.mxu0 0.0
    %195 = vmatprep.subr.mxu0 0.0
    %196 = vmatpush1.msra.mxu0 0.0
    %197 = vmatprep.subr.mxu0 0.0
    %198 = vmatpush1.msra.mxu0 0.0
    %199 = vmatprep.subr.mxu0 0.0
    %200 = vmatpush1.msra.mxu0 0.0
    %201 = vmatprep.subr.mxu0 0.0
    %202 = vmatpush1.msra.mxu0 0.0
    %203 = vmatprep.subr.mxu0 0.0
    %204 = vmatpush1.msra.mxu0 0.0
    %205 = vmatprep.subr.mxu0 0.0
    %206 = vmatpush1.msra.mxu0 0.0
    %207 = vmatprep.subr.mxu0 0.0
    %208 = vmatpush1.msra.mxu0 0.0
    %209 = vmatprep.subr.mxu0 0.0
    %210 = vmatpush1.msra.mxu0 0.0
    %211 = vmatprep.subr.mxu0 0.0
    %212 = vmatpush1.msra.mxu0 0.0
    %213 = vmatprep.subr.mxu0 0.0
    %214 = vmatpush1.msra.mxu0 0.0
    %215 = vmatprep.subr.mxu0 0.0
    %216 = vmatpush1.msra.mxu0 0.0
    %217 = vmatprep.subr.mxu0 0.0
    %218 = vmatpush1.msra.mxu0 0.0
    %219 = vmatprep.subr.mxu0 0.0
    %220 = vmatpush1.msra.mxu0 0.0
    %221 = vmatprep.subr.mxu0 0.0
    %222 = vmatpush1.msra.mxu0 0.0
    %223 = vmatprep.subr.mxu0 0.0
    %224 = vmatpush1.msra.mxu0 0.0
    %225 = vmatprep.subr.mxu0 0.0
    %226 = vmatpush1.msra.mxu0 0.0
    %227 = vmatprep.subr.mxu0 0.0
    %228 = vmatpush1.msra.mxu0 0.0
    %229 = vmatprep.subr.mxu0 0.0
    %230 = vmatpush1.msra.mxu0 0.0
    %231 = vmatprep.mubr.f32.mxu0 0.0
    %232 = vmatmul.mubr.f32.gmra.mrb[0].mxu0 %v94
    %v233 = vpop.f32.mrb[0].mxu0
    %v234 = vadd.f32 0.0, %v233
    %v235 = vpop.f32.mrb[0].mxu0
    %v236 = vadd.f32 0.0, %v235
    %237 = vdwg.mxu0
    %238 = vmatprep.subr.mxu0 %v65
    %239 = vmatpush1.msra.mxu0 %v64
    %240 = vmatprep.subr.mxu0 %v73
    %241 = vmatpush1.msra.mxu0 %v72
    %242 = vmatprep.subr.mxu0 %v81
    %243 = vmatpush1.msra.mxu0 %v80
    %244 = vmatprep.subr.mxu0 %v89
    %245 = vmatpush1.msra.mxu0 %v88
    %246 = vmatprep.subr.mxu0 0.0
    %247 = vmatpush1.msra.mxu0 0.0
    %248 = vmatprep.subr.mxu0 0.0
    %249 = vmatpush1.msra.mxu0 0.0
    %250 = vmatprep.subr.mxu0 0.0
    %251 = vmatpush1.msra.mxu0 0.0
    %252 = vmatprep.subr.mxu0 0.0
    %253 = vmatpush1.msra.mxu0 0.0
    %254 = vmatprep.subr.mxu0 0.0
    %255 = vmatpush1.msra.mxu0 0.0
    %256 = vmatprep.subr.mxu0 0.0
    %257 = vmatpush1.msra.mxu0 0.0
    %258 = vmatprep.subr.mxu0 0.0
    %259 = vmatpush1.msra.mxu0 0.0
    %260 = vmatprep.subr.mxu0 0.0
    %261 = vmatpush1.msra.mxu0 0.0
    %262 = vmatprep.subr.mxu0 0.0
    %263 = vmatpush1.msra.mxu0 0.0
    %264 = vmatprep.subr.mxu0 0.0
    %265 = vmatpush1.msra.mxu0 0.0
    %266 = vmatprep.subr.mxu0 0.0
    %267 = vmatpush1.msra.mxu0 0.0
    %268 = vmatprep.subr.mxu0 0.0
    %269 = vmatpush1.msra.mxu0 0.0
    %270 = vmatprep.subr.mxu0 0.0
    %271 = vmatpush1.msra.mxu0 0.0
    %272 = vmatprep.subr.mxu0 0.0
    %273 = vmatpush1.msra.mxu0 0.0
    %274 = vmatprep.subr.mxu0 0.0
    %275 = vmatpush1.msra.mxu0 0.0
    %276 = vmatprep.subr.mxu0 0.0
    %277 = vmatpush1.msra.mxu0 0.0
    %278 = vmatprep.subr.mxu0 0.0
    %279 = vmatpush1.msra.mxu0 0.0
    %280 = vmatprep.subr.mxu0 0.0
    %281 = vmatpush1.msra.mxu0 0.0
    %282 = vmatprep.subr.mxu0 0.0
    %283 = vmatpush1.msra.mxu0 0.0
    %284 = vmatprep.subr.mxu0 0.0
    %285 = vmatpush1.msra.mxu0 0.0
    %286 = vmatprep.subr.mxu0 0.0
    %287 = vmatpush1.msra.mxu0 0.0
    %288 = vmatprep.subr.mxu0 0.0
    %289 = vmatpush1.msra.mxu0 0.0
    %290 = vmatprep.subr.mxu0 0.0
    %291 = vmatpush1.msra.mxu0 0.0
    %292 = vmatprep.subr.mxu0 0.0
    %293 = vmatpush1.msra.mxu0 0.0
    %294 = vmatprep.subr.mxu0 0.0
    %295 = vmatpush1.msra.mxu0 0.0
    %296 = vmatprep.subr.mxu0 0.0
    %297 = vmatpush1.msra.mxu0 0.0
    %298 = vmatprep.subr.mxu0 0.0
    %299 = vmatpush1.msra.mxu0 0.0
    %300 = vmatprep.subr.mxu0 0.0
    %301 = vmatpush1.msra.mxu0 0.0
    %302 = vmatprep.mubr.f32.mxu0 0.0
    %303 = vmatmul.mubr.f32.gmra.mrb[0].mxu0 %v94
    %v304 = vpop.f32.mrb[0].mxu0
    %v305 = vadd.f32 0.0, %v304
    %v306 = vpop.f32.mrb[0].mxu0
    %v307 = vadd.f32 0.0, %v306
    %308 = vdwg.mxu0
    %309 = vmatprep.subr.mxu0 %v67
    %310 = vmatpush1.msra.mxu0 %v66
    %311 = vmatprep.subr.mxu0 %v75
    %312 = vmatpush1.msra.mxu0 %v74
    %313 = vmatprep.subr.mxu0 %v83
    %314 = vmatpush1.msra.mxu0 %v82
    %315 = vmatprep.subr.mxu0 %v91
    %316 = vmatpush1.msra.mxu0 %v90
    %317 = vmatprep.subr.mxu0 0.0
    %318 = vmatpush1.msra.mxu0 0.0
    %319 = vmatprep.subr.mxu0 0.0
    %320 = vmatpush1.msra.mxu0 0.0
    %321 = vmatprep.subr.mxu0 0.0
    %322 = vmatpush1.msra.mxu0 0.0
    %323 = vmatprep.subr.mxu0 0.0
    %324 = vmatpush1.msra.mxu0 0.0
    %325 = vmatprep.subr.mxu0 0.0
    %326 = vmatpush1.msra.mxu0 0.0
    %327 = vmatprep.subr.mxu0 0.0
    %328 = vmatpush1.msra.mxu0 0.0
    %329 = vmatprep.subr.mxu0 0.0
    %330 = vmatpush1.msra.mxu0 0.0
    %331 = vmatprep.subr.mxu0 0.0
    %332 = vmatpush1.msra.mxu0 0.0
    %333 = vmatprep.subr.mxu0 0.0
    %334 = vmatpush1.msra.mxu0 0.0
    %335 = vmatprep.subr.mxu0 0.0
    %336 = vmatpush1.msra.mxu0 0.0
    %337 = vmatprep.subr.mxu0 0.0
    %338 = vmatpush1.msra.mxu0 0.0
    %339 = vmatprep.subr.mxu0 0.0
    %340 = vmatpush1.msra.mxu0 0.0
    %341 = vmatprep.subr.mxu0 0.0
    %342 = vmatpush1.msra.mxu0 0.0
    %343 = vmatprep.subr.mxu0 0.0
    %344 = vmatpush1.msra.mxu0 0.0
    %345 = vmatprep.subr.mxu0 0.0
    %346 = vmatpush1.msra.mxu0 0.0
    %347 = vmatprep.subr.mxu0 0.0
    %348 = vmatpush1.msra.mxu0 0.0
    %349 = vmatprep.subr.mxu0 0.0
    %350 = vmatpush1.msra.mxu0 0.0
    %351 = vmatprep.subr.mxu0 0.0
    %352 = vmatpush1.msra.mxu0 0.0
    %353 = vmatprep.subr.mxu0 0.0
    %354 = vmatpush1.msra.mxu0 0.0
    %355 = vmatprep.subr.mxu0 0.0
    %356 = vmatpush1.msra.mxu0 0.0
    %357 = vmatprep.subr.mxu0 0.0
    %358 = vmatpush1.msra.mxu0 0.0
    %359 = vmatprep.subr.mxu0 0.0
    %360 = vmatpush1.msra.mxu0 0.0
    %361 = vmatprep.subr.mxu0 0.0
    %362 = vmatpush1.msra.mxu0 0.0
    %363 = vmatprep.subr.mxu0 0.0
    %364 = vmatpush1.msra.mxu0 0.0
    %365 = vmatprep.subr.mxu0 0.0
    %366 = vmatpush1.msra.mxu0 0.0
    %367 = vmatprep.subr.mxu0 0.0
    %368 = vmatpush1.msra.mxu0 0.0
    %369 = vmatprep.subr.mxu0 0.0
    %370 = vmatpush1.msra.mxu0 0.0
    %371 = vmatprep.subr.mxu0 0.0
    %372 = vmatpush1.msra.mxu0 0.0
    %373 = vmatprep.mubr.f32.mxu0 0.0
    %374 = vmatmul.mubr.f32.gmra.mrb[0].mxu0 %v94
    %v375 = vpop.f32.mrb[0].mxu0
    %v376 = vadd.f32 0.0, %v375
    %v377 = vpop.f32.mrb[0].mxu0
    %v378 = vadd.f32 0.0, %v377
    %379 = vdwg.mxu0
    %v380 = vadd.f32 %v163, %v58
    %v381 = vadd.f32 %v165, %v58
    %v382 = vadd.f32 %v234, %v58
    %v383 = vadd.f32 %v236, %v58
    %v384 = vadd.f32 %v305, %v58
    %v385 = vadd.f32 %v307, %v58
    %v386 = vadd.f32 %v376, %v58
    %v387 = vadd.f32 %v378, %v58
    %v389 = vsel %vm92, 0.0, 0
    %391 = vmatprep.subr.mxu0 0.0
    %392 = vmatpush1.msra.mxu0 %v54
    %393 = vmatprep.subr.mxu0 0.0
    %394 = vmatpush1.msra.mxu0 %v55
    %395 = vmatprep.subr.mxu0 0.0
    %396 = vmatpush1.msra.mxu0 %v56
    %397 = vmatprep.subr.mxu0 0.0
    %398 = vmatpush1.msra.mxu0 %v57
    %399 = vmatprep.subr.mxu0 0.0
    %400 = vmatpush1.msra.mxu0 0.0
    %401 = vmatprep.subr.mxu0 0.0
    %402 = vmatpush1.msra.mxu0 0.0
    %403 = vmatprep.subr.mxu0 0.0
    %404 = vmatpush1.msra.mxu0 0.0
    %405 = vmatprep.subr.mxu0 0.0
    %406 = vmatpush1.msra.mxu0 0.0
    %407 = vmatprep.subr.mxu0 0.0
    %408 = vmatpush1.msra.mxu0 0.0
    %409 = vmatprep.subr.mxu0 0.0
    %410 = vmatpush1.msra.mxu0 0.0
    %411 = vmatprep.subr.mxu0 0.0
    %412 = vmatpush1.msra.mxu0 0.0
    %413 = vmatprep.subr.mxu0 0.0
    %414 = vmatpush1.msra.mxu0 0.0
    %415 = vmatprep.subr.mxu0 0.0
    %416 = vmatpush1.msra.mxu0 0.0
    %417 = vmatprep.subr.mxu0 0.0
    %418 = vmatpush1.msra.mxu0 0.0
    %419 = vmatprep.subr.mxu0 0.0
    %420 = vmatpush1.msra.mxu0 0.0
    %421 = vmatprep.subr.mxu0 0.0
    %422 = vmatpush1.msra.mxu0 0.0
    %423 = vmatprep.subr.mxu0 0.0
    %424 = vmatpush1.msra.mxu0 0.0
    %425 = vmatprep.subr.mxu0 0.0
    %426 = vmatpush1.msra.mxu0 0.0
    %427 = vmatprep.subr.mxu0 0.0
    %428 = vmatpush1.msra.mxu0 0.0
    %429 = vmatprep.subr.mxu0 0.0
    %430 = vmatpush1.msra.mxu0 0.0
    %431 = vmatprep.subr.mxu0 0.0
    %432 = vmatpush1.msra.mxu0 0.0
    %433 = vmatprep.subr.mxu0 0.0
    %434 = vmatpush1.msra.mxu0 0.0
    %435 = vmatprep.subr.mxu0 0.0
    %436 = vmatpush1.msra.mxu0 0.0
    %437 = vmatprep.subr.mxu0 0.0
    %438 = vmatpush1.msra.mxu0 0.0
    %439 = vmatprep.subr.mxu0 0.0
    %440 = vmatpush1.msra.mxu0 0.0
    %441 = vmatprep.subr.mxu0 0.0
    %442 = vmatpush1.msra.mxu0 0.0
    %443 = vmatprep.subr.mxu0 0.0
    %444 = vmatpush1.msra.mxu0 0.0
    %445 = vmatprep.subr.mxu0 0.0
    %446 = vmatpush1.msra.mxu0 0.0
    %447 = vmatprep.subr.mxu0 0.0
    %448 = vmatpush1.msra.mxu0 0.0
    %449 = vmatprep.subr.mxu0 0.0
    %450 = vmatpush1.msra.mxu0 0.0
    %451 = vmatprep.subr.mxu0 0.0
    %452 = vmatpush1.msra.mxu0 0.0
    %453 = vmatprep.subr.mxu0 0.0
    %454 = vmatpush1.msra.mxu0 0.0
    %455 = vmatprep.mubr.f32.mxu0 0.0
    %456 = vmatmul.mubr.f32.gmra.mrb[0].mxu0 %v389
    %v457 = vpop.f32.mrb[0].mxu0
    %v458 = vadd.f32 0.0, %v457
    %v459 = vpop.f32.mrb[0].mxu0
    %460 = vdwg.mxu0
    %v461 = vadd.f32 %v380, %v458
    %v462 = vxor.u32 %v461, 2147483648
    %v463 = vmul.f32 %v462, 1.442695
    %v464 = vpow.pop %v463
    %v465 = vadd.f32 %v464, 1.0
    %v466 = vrcp.pop %v465
    %v467 = vmul.f32 1.0, %v466
    %v468 = vtanh.pop %v461
    %v469 = vmul.f32 %v467, 0.0
    %471 = vrot.lane.b32.xlu0 %v468, 64
    %v472 = vpop.permute.xlu0 %471
    %v474 = vmul.f32 %v467, %v472
    %476 = vrot.lane.b32.xlu0 %v474, 32
    %v477 = vpop.permute.xlu0 %476
    %v479 = vadd.f32 %v469, %v477
    %v480 = vtanh.pop %v479
    %482 = vrot.lane.b32.xlu0 %v480, 64
    %v483 = vpop.permute.xlu0 %482
    %v485 = vmul.f32 %v467, %v483
    %487 = vrot.lane.b32.xlu0 %v485, 32
    %v488 = vpop.permute.xlu0 %487
    %v489 = vsel %vm92, %v488, 0
    %491 = vmatprep.subr.mxu0 0.0
    %492 = vmatpush1.msra.mxu0 %v54
    %493 = vmatprep.subr.mxu0 0.0
    %494 = vmatpush1.msra.mxu0 %v55
    %495 = vmatprep.subr.mxu0 0.0
    %496 = vmatpush1.msra.mxu0 %v56
    %497 = vmatprep.subr.mxu0 0.0
    %498 = vmatpush1.msra.mxu0 %v57
    %499 = vmatprep.subr.mxu0 0.0
    %500 = vmatpush1.msra.mxu0 0.0
    %501 = vmatprep.subr.mxu0 0.0
    %502 = vmatpush1.msra.mxu0 0.0
    %503 = vmatprep.subr.mxu0 0.0
    %504 = vmatpush1.msra.mxu0 0.0
    %505 = vmatprep.subr.mxu0 0.0
    %506 = vmatpush1.msra.mxu0 0.0
    %507 = vmatprep.subr.mxu0 0.0
    %508 = vmatpush1.msra.mxu0 0.0
    %509 = vmatprep.subr.mxu0 0.0
    %510 = vmatpush1.msra.mxu0 0.0
    %511 = vmatprep.subr.mxu0 0.0
    %512 = vmatpush1.msra.mxu0 0.0
    %513 = vmatprep.subr.mxu0 0.0
    %514 = vmatpush1.msra.mxu0 0.0
    %515 = vmatprep.subr.mxu0 0.0
    %516 = vmatpush1.msra.mxu0 0.0
    %517 = vmatprep.subr.mxu0 0.0
    %518 = vmatpush1.msra.mxu0 0.0
    %519 = vmatprep.subr.mxu0 0.0
    %520 = vmatpush1.msra.mxu0 0.0
    %521 = vmatprep.subr.mxu0 0.0
    %522 = vmatpush1.msra.mxu0 0.0
    %523 = vmatprep.subr.mxu0 0.0
    %524 = vmatpush1.msra.mxu0 0.0
    %525 = vmatprep.subr.mxu0 0.0
    %526 = vmatpush1.msra.mxu0 0.0
    %527 = vmatprep.subr.mxu0 0.0
    %528 = vmatpush1.msra.mxu0 0.0
    %529 = vmatprep.subr.mxu0 0.0
    %530 = vmatpush1.msra.mxu0 0.0
    %531 = vmatprep.subr.mxu0 0.0
    %532 = vmatpush1.msra.mxu0 0.0
    %533 = vmatprep.subr.mxu0 0.0
    %534 = vmatpush1.msra.mxu0 0.0
    %535 = vmatprep.subr.mxu0 0.0
    %536 = vmatpush1.msra.mxu0 0.0
    %537 = vmatprep.subr.mxu0 0.0
    %538 = vmatpush1.msra.mxu0 0.0
    %539 = vmatprep.subr.mxu0 0.0
    %540 = vmatpush1.msra.mxu0 0.0
    %541 = vmatprep.subr.mxu0 0.0
    %542 = vmatpush1.msra.mxu0 0.0
    %543 = vmatprep.subr.mxu0 0.0
    %544 = vmatpush1.msra.mxu0 0.0
    %545 = vmatprep.subr.mxu0 0.0
    %546 = vmatpush1.msra.mxu0 0.0
    %547 = vmatprep.subr.mxu0 0.0
    %548 = vmatpush1.msra.mxu0 0.0
    %549 = vmatprep.subr.mxu0 0.0
    %550 = vmatpush1.msra.mxu0 0.0
    %551 = vmatprep.subr.mxu0 0.0
    %552 = vmatpush1.msra.mxu0 0.0
    %553 = vmatprep.subr.mxu0 0.0
    %554 = vmatpush1.msra.mxu0 0.0
    %555 = vmatprep.mubr.f32.mxu0 0.0
    %556 = vmatmul.mubr.f32.gmra.mrb[0].mxu0 %v489
    %v557 = vpop.f32.mrb[0].mxu0
    %v558 = vadd.f32 0.0, %v557
    %v559 = vpop.f32.mrb[0].mxu0
    %560 = vdwg.mxu0
    %v561 = vadd.f32 %v381, %v558
    %v562 = vxor.u32 %v561, 2147483648
    %v563 = vmul.f32 %v562, 1.442695
    %v564 = vpow.pop %v563
    %v565 = vadd.f32 %v564, 1.0
    %v566 = vrcp.pop %v565
    %v567 = vmul.f32 1.0, %v566
    %v568 = vtanh.pop %v561
    %v569 = vmul.f32 %v567, %v479
    %571 = vrot.lane.b32.xlu0 %v568, 64
    %v572 = vpop.permute.xlu0 %571
    %v574 = vmul.f32 %v567, %v572
    %576 = vrot.lane.b32.xlu0 %v574, 32
    %v577 = vpop.permute.xlu0 %576
    %v579 = vadd.f32 %v569, %v577
    %v580 = vtanh.pop %v579
    %582 = vrot.lane.b32.xlu0 %v580, 64
    %v583 = vpop.permute.xlu0 %582
    %v585 = vmul.f32 %v567, %v583
    %587 = vrot.lane.b32.xlu0 %v585, 32
    %v588 = vpop.permute.xlu0 %587
    %v589 = vsel %vm92, %v588, 0
    %591 = vmatprep.subr.mxu0 0.0
    %592 = vmatpush1.msra.mxu0 %v54
    %593 = vmatprep.subr.mxu0 0.0
    %594 = vmatpush1.msra.mxu0 %v55
    %595 = vmatprep.subr.mxu0 0.0
    %596 = vmatpush1.msra.mxu0 %v56
    %597 = vmatprep.subr.mxu0 0.0
    %598 = vmatpush1.msra.mxu0 %v57
    %599 = vmatprep.subr.mxu0 0.0
    %600 = vmatpush1.msra.mxu0 0.0
    %601 = vmatprep.subr.mxu0 0.0
    %602 = vmatpush1.msra.mxu0 0.0
    %603 = vmatprep.subr.mxu0 0.0
    %604 = vmatpush1.msra.mxu0 0.0
    %605 = vmatprep.subr.mxu0 0.0
    %606 = vmatpush1.msra.mxu0 0.0
    %607 = vmatprep.subr.mxu0 0.0
    %608 = vmatpush1.msra.mxu0 0.0
    %609 = vmatprep.subr.mxu0 0.0
    %610 = vmatpush1.msra.mxu0 0.0
    %611 = vmatprep.subr.mxu0 0.0
    %612 = vmatpush1.msra.mxu0 0.0
    %613 = vmatprep.subr.mxu0 0.0
    %614 = vmatpush1.msra.mxu0 0.0
    %615 = vmatprep.subr.mxu0 0.0
    %616 = vmatpush1.msra.mxu0 0.0
    %617 = vmatprep.subr.mxu0 0.0
    %618 = vmatpush1.msra.mxu0 0.0
    %619 = vmatprep.subr.mxu0 0.0
    %620 = vmatpush1.msra.mxu0 0.0
    %621 = vmatprep.subr.mxu0 0.0
    %622 = vmatpush1.msra.mxu0 0.0
    %623 = vmatprep.subr.mxu0 0.0
    %624 = vmatpush1.msra.mxu0 0.0
    %625 = vmatprep.subr.mxu0 0.0
    %626 = vmatpush1.msra.mxu0 0.0
    %627 = vmatprep.subr.mxu0 0.0
    %628 = vmatpush1.msra.mxu0 0.0
    %629 = vmatprep.subr.mxu0 0.0
    %630 = vmatpush1.msra.mxu0 0.0
    %631 = vmatprep.subr.mxu0 0.0
    %632 = vmatpush1.msra.mxu0 0.0
    %633 = vmatprep.subr.mxu0 0.0
    %634 = vmatpush1.msra.mxu0 0.0
    %635 = vmatprep.subr.mxu0 0.0
    %636 = vmatpush1.msra.mxu0 0.0
    %637 = vmatprep.subr.mxu0 0.0
    %638 = vmatpush1.msra.mxu0 0.0
    %639 = vmatprep.subr.mxu0 0.0
    %640 = vmatpush1.msra.mxu0 0.0
    %641 = vmatprep.subr.mxu0 0.0
    %642 = vmatpush1.msra.mxu0 0.0
    %643 = vmatprep.subr.mxu0 0.0
    %644 = vmatpush1.msra.mxu0 0.0
    %645 = vmatprep.subr.mxu0 0.0
    %646 = vmatpush1.msra.mxu0 0.0
    %647 = vmatprep.subr.mxu0 0.0
    %648 = vmatpush1.msra.mxu0 0.0
    %649 = vmatprep.subr.mxu0 0.0
    %650 = vmatpush1.msra.mxu0 0.0
    %651 = vmatprep.subr.mxu0 0.0
    %652 = vmatpush1.msra.mxu0 0.0
    %653 = vmatprep.subr.mxu0 0.0
    %654 = vmatpush1.msra.mxu0 0.0
    %655 = vmatprep.mubr.f32.mxu0 0.0
    %656 = vmatmul.mubr.f32.gmra.mrb[0].mxu0 %v589
    %v657 = vpop.f32.mrb[0].mxu0
    %v658 = vadd.f32 0.0, %v657
    %v659 = vpop.f32.mrb[0].mxu0
    %660 = vdwg.mxu0
    %v661 = vadd.f32 %v382, %v658
    %v662 = vxor.u32 %v661, 2147483648
    %v663 = vmul.f32 %v662, 1.442695
    %v664 = vpow.pop %v663
    %v665 = vadd.f32 %v664, 1.0
    %v666 = vrcp.pop %v665
    %v667 = vmul.f32 1.0, %v666
    %v668 = vtanh.pop %v661
    %v669 = vmul.f32 %v667, %v579
    %671 = vrot.lane.b32.xlu0 %v668, 64
    %v672 = vpop.permute.xlu0 %671
    %v674 = vmul.f32 %v667, %v672
    %676 = vrot.lane.b32.xlu0 %v674, 32
    %v677 = vpop.permute.xlu0 %676
    %v679 = vadd.f32 %v669, %v677
    %v680 = vtanh.pop %v679
    %682 = vrot.lane.b32.xlu0 %v680, 64
    %v683 = vpop.permute.xlu0 %682
    %v685 = vmul.f32 %v667, %v683
    %687 = vrot.lane.b32.xlu0 %v685, 32
    %v688 = vpop.permute.xlu0 %687
    %v689 = vsel %vm92, %v688, 0
    %691 = vmatprep.subr.mxu0 0.0
    %692 = vmatpush1.msra.mxu0 %v54
    %693 = vmatprep.subr.mxu0 0.0
    %694 = vmatpush1.msra.mxu0 %v55
    %695 = vmatprep.subr.mxu0 0.0
    %696 = vmatpush1.msra.mxu0 %v56
    %697 = vmatprep.subr.mxu0 0.0
    %698 = vmatpush1.msra.mxu0 %v57
    %699 = vmatprep.subr.mxu0 0.0
    %700 = vmatpush1.msra.mxu0 0.0
    %701 = vmatprep.subr.mxu0 0.0
    %702 = vmatpush1.msra.mxu0 0.0
    %703 = vmatprep.subr.mxu0 0.0
    %704 = vmatpush1.msra.mxu0 0.0
    %705 = vmatprep.subr.mxu0 0.0
    %706 = vmatpush1.msra.mxu0 0.0
    %707 = vmatprep.subr.mxu0 0.0
    %708 = vmatpush1.msra.mxu0 0.0
    %709 = vmatprep.subr.mxu0 0.0
    %710 = vmatpush1.msra.mxu0 0.0
    %711 = vmatprep.subr.mxu0 0.0
    %712 = vmatpush1.msra.mxu0 0.0
    %713 = vmatprep.subr.mxu0 0.0
    %714 = vmatpush1.msra.mxu0 0.0
    %715 = vmatprep.subr.mxu0 0.0
    %716 = vmatpush1.msra.mxu0 0.0
    %717 = vmatprep.subr.mxu0 0.0
    %718 = vmatpush1.msra.mxu0 0.0
    %719 = vmatprep.subr.mxu0 0.0
    %720 = vmatpush1.msra.mxu0 0.0
    %721 = vmatprep.subr.mxu0 0.0
    %722 = vmatpush1.msra.mxu0 0.0
    %723 = vmatprep.subr.mxu0 0.0
    %724 = vmatpush1.msra.mxu0 0.0
    %725 = vmatprep.subr.mxu0 0.0
    %726 = vmatpush1.msra.mxu0 0.0
    %727 = vmatprep.subr.mxu0 0.0
    %728 = vmatpush1.msra.mxu0 0.0
    %729 = vmatprep.subr.mxu0 0.0
    %730 = vmatpush1.msra.mxu0 0.0
    %731 = vmatprep.subr.mxu0 0.0
    %732 = vmatpush1.msra.mxu0 0.0
    %733 = vmatprep.subr.mxu0 0.0
    %734 = vmatpush1.msra.mxu0 0.0
    %735 = vmatprep.subr.mxu0 0.0
    %736 = vmatpush1.msra.mxu0 0.0
    %737 = vmatprep.subr.mxu0 0.0
    %738 = vmatpush1.msra.mxu0 0.0
    %739 = vmatprep.subr.mxu0 0.0
    %740 = vmatpush1.msra.mxu0 0.0
    %741 = vmatprep.subr.mxu0 0.0
    %742 = vmatpush1.msra.mxu0 0.0
    %743 = vmatprep.subr.mxu0 0.0
    %744 = vmatpush1.msra.mxu0 0.0
    %745 = vmatprep.subr.mxu0 0.0
    %746 = vmatpush1.msra.mxu0 0.0
    %747 = vmatprep.subr.mxu0 0.0
    %748 = vmatpush1.msra.mxu0 0.0
    %749 = vmatprep.subr.mxu0 0.0
    %750 = vmatpush1.msra.mxu0 0.0
    %751 = vmatprep.subr.mxu0 0.0
    %752 = vmatpush1.msra.mxu0 0.0
    %753 = vmatprep.subr.mxu0 0.0
    %754 = vmatpush1.msra.mxu0 0.0
    %755 = vmatprep.mubr.f32.mxu0 0.0
    %756 = vmatmul.mubr.f32.gmra.mrb[0].mxu0 %v689
    %v757 = vpop.f32.mrb[0].mxu0
    %v758 = vadd.f32 0.0, %v757
    %v759 = vpop.f32.mrb[0].mxu0
    %760 = vdwg.mxu0
    %v761 = vadd.f32 %v383, %v758
    %v762 = vxor.u32 %v761, 2147483648
    %v763 = vmul.f32 %v762, 1.442695
    %v764 = vpow.pop %v763
    %v765 = vadd.f32 %v764, 1.0
    %v766 = vrcp.pop %v765
    %v767 = vmul.f32 1.0, %v766
    %v768 = vtanh.pop %v761
    %v769 = vmul.f32 %v767, %v679
    %771 = vrot.lane.b32.xlu0 %v768, 64
    %v772 = vpop.permute.xlu0 %771
    %v774 = vmul.f32 %v767, %v772
    %776 = vrot.lane.b32.xlu0 %v774, 32
    %v777 = vpop.permute.xlu0 %776
    %v779 = vadd.f32 %v769, %v777
    %v780 = vtanh.pop %v779
    %782 = vrot.lane.b32.xlu0 %v780, 64
    %v783 = vpop.permute.xlu0 %782
    %v785 = vmul.f32 %v767, %v783
    %787 = vrot.lane.b32.xlu0 %v785, 32
    %v788 = vpop.permute.xlu0 %787
    %v789 = vsel %vm92, %v788, 0
    %791 = vmatprep.subr.mxu0 0.0
    %792 = vmatpush1.msra.mxu0 %v54
    %793 = vmatprep.subr.mxu0 0.0
    %794 = vmatpush1.msra.mxu0 %v55
    %795 = vmatprep.subr.mxu0 0.0
    %796 = vmatpush1.msra.mxu0 %v56
    %797 = vmatprep.subr.mxu0 0.0
    %798 = vmatpush1.msra.mxu0 %v57
    %799 = vmatprep.subr.mxu0 0.0
    %800 = vmatpush1.msra.mxu0 0.0
    %801 = vmatprep.subr.mxu0 0.0
    %802 = vmatpush1.msra.mxu0 0.0
    %803 = vmatprep.subr.mxu0 0.0
    %804 = vmatpush1.msra.mxu0 0.0
    %805 = vmatprep.subr.mxu0 0.0
    %806 = vmatpush1.msra.mxu0 0.0
    %807 = vmatprep.subr.mxu0 0.0
    %808 = vmatpush1.msra.mxu0 0.0
    %809 = vmatprep.subr.mxu0 0.0
    %810 = vmatpush1.msra.mxu0 0.0
    %811 = vmatprep.subr.mxu0 0.0
    %812 = vmatpush1.msra.mxu0 0.0
    %813 = vmatprep.subr.mxu0 0.0
    %814 = vmatpush1.msra.mxu0 0.0
    %815 = vmatprep.subr.mxu0 0.0
    %816 = vmatpush1.msra.mxu0 0.0
    %817 = vmatprep.subr.mxu0 0.0
    %818 = vmatpush1.msra.mxu0 0.0
    %819 = vmatprep.subr.mxu0 0.0
    %820 = vmatpush1.msra.mxu0 0.0
    %821 = vmatprep.subr.mxu0 0.0
    %822 = vmatpush1.msra.mxu0 0.0
    %823 = vmatprep.subr.mxu0 0.0
    %824 = vmatpush1.msra.mxu0 0.0
    %825 = vmatprep.subr.mxu0 0.0
    %826 = vmatpush1.msra.mxu0 0.0
    %827 = vmatprep.subr.mxu0 0.0
    %828 = vmatpush1.msra.mxu0 0.0
    %829 = vmatprep.subr.mxu0 0.0
    %830 = vmatpush1.msra.mxu0 0.0
    %831 = vmatprep.subr.mxu0 0.0
    %832 = vmatpush1.msra.mxu0 0.0
    %833 = vmatprep.subr.mxu0 0.0
    %834 = vmatpush1.msra.mxu0 0.0
    %835 = vmatprep.subr.mxu0 0.0
    %836 = vmatpush1.msra.mxu0 0.0
    %837 = vmatprep.subr.mxu0 0.0
    %838 = vmatpush1.msra.mxu0 0.0
    %839 = vmatprep.subr.mxu0 0.0
    %840 = vmatpush1.msra.mxu0 0.0
    %841 = vmatprep.subr.mxu0 0.0
    %842 = vmatpush1.msra.mxu0 0.0
    %843 = vmatprep.subr.mxu0 0.0
    %844 = vmatpush1.msra.mxu0 0.0
    %845 = vmatprep.subr.mxu0 0.0
    %846 = vmatpush1.msra.mxu0 0.0
    %847 = vmatprep.subr.mxu0 0.0
    %848 = vmatpush1.msra.mxu0 0.0
    %849 = vmatprep.subr.mxu0 0.0
    %850 = vmatpush1.msra.mxu0 0.0
    %851 = vmatprep.subr.mxu0 0.0
    %852 = vmatpush1.msra.mxu0 0.0
    %853 = vmatprep.subr.mxu0 0.0
    %854 = vmatpush1.msra.mxu0 0.0
    %855 = vmatprep.mubr.f32.mxu0 0.0
    %856 = vmatmul.mubr.f32.gmra.mrb[0].mxu0 %v789
    %v857 = vpop.f32.mrb[0].mxu0
    %v858 = vadd.f32 0.0, %v857
    %v859 = vpop.f32.mrb[0].mxu0
    %860 = vdwg.mxu0
    %v861 = vadd.f32 %v384, %v858
    %v862 = vxor.u32 %v861, 2147483648
    %v863 = vmul.f32 %v862, 1.442695
    %v864 = vpow.pop %v863
    %v865 = vadd.f32 %v864, 1.0
    %v866 = vrcp.pop %v865
    %v867 = vmul.f32 1.0, %v866
    %v868 = vtanh.pop %v861
    %v869 = vmul.f32 %v867, %v779
    %871 = vrot.lane.b32.xlu0 %v868, 64
    %v872 = vpop.permute.xlu0 %871
    %v874 = vmul.f32 %v867, %v872
    %876 = vrot.lane.b32.xlu0 %v874, 32
    %v877 = vpop.permute.xlu0 %876
    %v879 = vadd.f32 %v869, %v877
    %v880 = vtanh.pop %v879
    %882 = vrot.lane.b32.xlu0 %v880, 64
    %v883 = vpop.permute.xlu0 %882
    %v885 = vmul.f32 %v867, %v883
    %887 = vrot.lane.b32.xlu0 %v885, 32
    %v888 = vpop.permute.xlu0 %887
    %v889 = vsel %vm92, %v888, 0
    %891 = vmatprep.subr.mxu0 0.0
    %892 = vmatpush1.msra.mxu0 %v54
    %893 = vmatprep.subr.mxu0 0.0
    %894 = vmatpush1.msra.mxu0 %v55
    %895 = vmatprep.subr.mxu0 0.0
    %896 = vmatpush1.msra.mxu0 %v56
    %897 = vmatprep.subr.mxu0 0.0
    %898 = vmatpush1.msra.mxu0 %v57
    %899 = vmatprep.subr.mxu0 0.0
    %900 = vmatpush1.msra.mxu0 0.0
    %901 = vmatprep.subr.mxu0 0.0
    %902 = vmatpush1.msra.mxu0 0.0
    %903 = vmatprep.subr.mxu0 0.0
    %904 = vmatpush1.msra.mxu0 0.0
    %905 = vmatprep.subr.mxu0 0.0
    %906 = vmatpush1.msra.mxu0 0.0
    %907 = vmatprep.subr.mxu0 0.0
    %908 = vmatpush1.msra.mxu0 0.0
    %909 = vmatprep.subr.mxu0 0.0
    %910 = vmatpush1.msra.mxu0 0.0
    %911 = vmatprep.subr.mxu0 0.0
    %912 = vmatpush1.msra.mxu0 0.0
    %913 = vmatprep.subr.mxu0 0.0
    %914 = vmatpush1.msra.mxu0 0.0
    %915 = vmatprep.subr.mxu0 0.0
    %916 = vmatpush1.msra.mxu0 0.0
    %917 = vmatprep.subr.mxu0 0.0
    %918 = vmatpush1.msra.mxu0 0.0
    %919 = vmatprep.subr.mxu0 0.0
    %920 = vmatpush1.msra.mxu0 0.0
    %921 = vmatprep.subr.mxu0 0.0
    %922 = vmatpush1.msra.mxu0 0.0
    %923 = vmatprep.subr.mxu0 0.0
    %924 = vmatpush1.msra.mxu0 0.0
    %925 = vmatprep.subr.mxu0 0.0
    %926 = vmatpush1.msra.mxu0 0.0
    %927 = vmatprep.subr.mxu0 0.0
    %928 = vmatpush1.msra.mxu0 0.0
    %929 = vmatprep.subr.mxu0 0.0
    %930 = vmatpush1.msra.mxu0 0.0
    %931 = vmatprep.subr.mxu0 0.0
    %932 = vmatpush1.msra.mxu0 0.0
    %933 = vmatprep.subr.mxu0 0.0
    %934 = vmatpush1.msra.mxu0 0.0
    %935 = vmatprep.subr.mxu0 0.0
    %936 = vmatpush1.msra.mxu0 0.0
    %937 = vmatprep.subr.mxu0 0.0
    %938 = vmatpush1.msra.mxu0 0.0
    %939 = vmatprep.subr.mxu0 0.0
    %940 = vmatpush1.msra.mxu0 0.0
    %941 = vmatprep.subr.mxu0 0.0
    %942 = vmatpush1.msra.mxu0 0.0
    %943 = vmatprep.subr.mxu0 0.0
    %944 = vmatpush1.msra.mxu0 0.0
    %945 = vmatprep.subr.mxu0 0.0
    %946 = vmatpush1.msra.mxu0 0.0
    %947 = vmatprep.subr.mxu0 0.0
    %948 = vmatpush1.msra.mxu0 0.0
    %949 = vmatprep.subr.mxu0 0.0
    %950 = vmatpush1.msra.mxu0 0.0
    %951 = vmatprep.subr.mxu0 0.0
    %952 = vmatpush1.msra.mxu0 0.0
    %953 = vmatprep.subr.mxu0 0.0
    %954 = vmatpush1.msra.mxu0 0.0
    %955 = vmatprep.mubr.f32.mxu0 0.0
    %956 = vmatmul.mubr.f32.gmra.mrb[0].mxu0 %v889
    %v957 = vpop.f32.mrb[0].mxu0
    %v958 = vadd.f32 0.0, %v957
    %v959 = vpop.f32.mrb[0].mxu0
    %960 = vdwg.mxu0
    %v961 = vadd.f32 %v385, %v958
    %v962 = vxor.u32 %v961, 2147483648
    %v963 = vmul.f32 %v962, 1.442695
    %v964 = vpow.pop %v963
    %v965 = vadd.f32 %v964, 1.0
    %v966 = vrcp.pop %v965
    %v967 = vmul.f32 1.0, %v966
    %v968 = vtanh.pop %v961
    %v969 = vmul.f32 %v967, %v879
    %971 = vrot.lane.b32.xlu0 %v968, 64
    %v972 = vpop.permute.xlu0 %971
    %v974 = vmul.f32 %v967, %v972
    %976 = vrot.lane.b32.xlu0 %v974, 32
    %v977 = vpop.permute.xlu0 %976
    %v979 = vadd.f32 %v969, %v977
    %v980 = vtanh.pop %v979
    %982 = vrot.lane.b32.xlu0 %v980, 64
    %v983 = vpop.permute.xlu0 %982
    %v985 = vmul.f32 %v967, %v983
    %987 = vrot.lane.b32.xlu0 %v985, 32
    %v988 = vpop.permute.xlu0 %987
    %v989 = vsel %vm92, %v988, 0
    %991 = vmatprep.subr.mxu0 0.0
    %992 = vmatpush1.msra.mxu0 %v54
    %993 = vmatprep.subr.mxu0 0.0
    %994 = vmatpush1.msra.mxu0 %v55
    %995 = vmatprep.subr.mxu0 0.0
    %996 = vmatpush1.msra.mxu0 %v56
    %997 = vmatprep.subr.mxu0 0.0
    %998 = vmatpush1.msra.mxu0 %v57
    %999 = vmatprep.subr.mxu0 0.0
    %1000 = vmatpush1.msra.mxu0 0.0
    %1001 = vmatprep.subr.mxu0 0.0
    %1002 = vmatpush1.msra.mxu0 0.0
    %1003 = vmatprep.subr.mxu0 0.0
    %1004 = vmatpush1.msra.mxu0 0.0
    %1005 = vmatprep.subr.mxu0 0.0
    %1006 = vmatpush1.msra.mxu0 0.0
    %1007 = vmatprep.subr.mxu0 0.0
    %1008 = vmatpush1.msra.mxu0 0.0
    %1009 = vmatprep.subr.mxu0 0.0
    %1010 = vmatpush1.msra.mxu0 0.0
    %1011 = vmatprep.subr.mxu0 0.0
    %1012 = vmatpush1.msra.mxu0 0.0
    %1013 = vmatprep.subr.mxu0 0.0
    %1014 = vmatpush1.msra.mxu0 0.0
    %1015 = vmatprep.subr.mxu0 0.0
    %1016 = vmatpush1.msra.mxu0 0.0
    %1017 = vmatprep.subr.mxu0 0.0
    %1018 = vmatpush1.msra.mxu0 0.0
    %1019 = vmatprep.subr.mxu0 0.0
    %1020 = vmatpush1.msra.mxu0 0.0
    %1021 = vmatprep.subr.mxu0 0.0
    %1022 = vmatpush1.msra.mxu0 0.0
    %1023 = vmatprep.subr.mxu0 0.0
    %1024 = vmatpush1.msra.mxu0 0.0
    %1025 = vmatprep.subr.mxu0 0.0
    %1026 = vmatpush1.msra.mxu0 0.0
    %1027 = vmatprep.subr.mxu0 0.0
    %1028 = vmatpush1.msra.mxu0 0.0
    %1029 = vmatprep.subr.mxu0 0.0
    %1030 = vmatpush1.msra.mxu0 0.0
    %1031 = vmatprep.subr.mxu0 0.0
    %1032 = vmatpush1.msra.mxu0 0.0
    %1033 = vmatprep.subr.mxu0 0.0
    %1034 = vmatpush1.msra.mxu0 0.0
    %1035 = vmatprep.subr.mxu0 0.0
    %1036 = vmatpush1.msra.mxu0 0.0
    %1037 = vmatprep.subr.mxu0 0.0
    %1038 = vmatpush1.msra.mxu0 0.0
    %1039 = vmatprep.subr.mxu0 0.0
    %1040 = vmatpush1.msra.mxu0 0.0
    %1041 = vmatprep.subr.mxu0 0.0
    %1042 = vmatpush1.msra.mxu0 0.0
    %1043 = vmatprep.subr.mxu0 0.0
    %1044 = vmatpush1.msra.mxu0 0.0
    %1045 = vmatprep.subr.mxu0 0.0
    %1046 = vmatpush1.msra.mxu0 0.0
    %1047 = vmatprep.subr.mxu0 0.0
    %1048 = vmatpush1.msra.mxu0 0.0
    %1049 = vmatprep.subr.mxu0 0.0
    %1050 = vmatpush1.msra.mxu0 0.0
    %1051 = vmatprep.subr.mxu0 0.0
    %1052 = vmatpush1.msra.mxu0 0.0
    %1053 = vmatprep.subr.mxu0 0.0
    %1054 = vmatpush1.msra.mxu0 0.0
    %1055 = vmatprep.mubr.f32.mxu0 0.0
    %1056 = vmatmul.mubr.f32.gmra.mrb[0].mxu0 %v989
    %v1057 = vpop.f32.mrb[0].mxu0
    %v1058 = vadd.f32 0.0, %v1057
    %v1059 = vpop.f32.mrb[0].mxu0
    %1060 = vdwg.mxu0
    %v1061 = vadd.f32 %v386, %v1058
    %v1062 = vxor.u32 %v1061, 2147483648
    %v1063 = vmul.f32 %v1062, 1.442695
    %v1064 = vpow.pop %v1063
    %v1065 = vadd.f32 %v1064, 1.0
    %v1066 = vrcp.pop %v1065
    %v1067 = vmul.f32 1.0, %v1066
    %v1068 = vtanh.pop %v1061
    %v1069 = vmul.f32 %v1067, %v979
    %1071 = vrot.lane.b32.xlu0 %v1068, 64
    %v1072 = vpop.permute.xlu0 %1071
    %v1074 = vmul.f32 %v1067, %v1072
    %1076 = vrot.lane.b32.xlu0 %v1074, 32
    %v1077 = vpop.permute.xlu0 %1076
    %v1079 = vadd.f32 %v1069, %v1077
    %v1080 = vtanh.pop %v1079
    %1082 = vrot.lane.b32.xlu0 %v1080, 64
    %v1083 = vpop.permute.xlu0 %1082
    %v1085 = vmul.f32 %v1067, %v1083
    %1087 = vrot.lane.b32.xlu0 %v1085, 32
    %v1088 = vpop.permute.xlu0 %1087
    %v1089 = vsel %vm92, %v1088, 0
    %1091 = vmatprep.subr.mxu0 0.0
    %1092 = vmatpush1.msra.mxu0 %v54
    %1093 = vmatprep.subr.mxu0 0.0
    %1094 = vmatpush1.msra.mxu0 %v55
    %1095 = vmatprep.subr.mxu0 0.0
    %1096 = vmatpush1.msra.mxu0 %v56
    %1097 = vmatprep.subr.mxu0 0.0
    %1098 = vmatpush1.msra.mxu0 %v57
    %1099 = vmatprep.subr.mxu0 0.0
    %1100 = vmatpush1.msra.mxu0 0.0
    %1101 = vmatprep.subr.mxu0 0.0
    %1102 = vmatpush1.msra.mxu0 0.0
    %1103 = vmatprep.subr.mxu0 0.0
    %1104 = vmatpush1.msra.mxu0 0.0
    %1105 = vmatprep.subr.mxu0 0.0
    %1106 = vmatpush1.msra.mxu0 0.0
    %1107 = vmatprep.subr.mxu0 0.0
    %1108 = vmatpush1.msra.mxu0 0.0
    %1109 = vmatprep.subr.mxu0 0.0
    %1110 = vmatpush1.msra.mxu0 0.0
    %1111 = vmatprep.subr.mxu0 0.0
    %1112 = vmatpush1.msra.mxu0 0.0
    %1113 = vmatprep.subr.mxu0 0.0
    %1114 = vmatpush1.msra.mxu0 0.0
    %1115 = vmatprep.subr.mxu0 0.0
    %1116 = vmatpush1.msra.mxu0 0.0
    %1117 = vmatprep.subr.mxu0 0.0
    %1118 = vmatpush1.msra.mxu0 0.0
    %1119 = vmatprep.subr.mxu0 0.0
    %1120 = vmatpush1.msra.mxu0 0.0
    %1121 = vmatprep.subr.mxu0 0.0
    %1122 = vmatpush1.msra.mxu0 0.0
    %1123 = vmatprep.subr.mxu0 0.0
    %1124 = vmatpush1.msra.mxu0 0.0
    %1125 = vmatprep.subr.mxu0 0.0
    %1126 = vmatpush1.msra.mxu0 0.0
    %1127 = vmatprep.subr.mxu0 0.0
    %1128 = vmatpush1.msra.mxu0 0.0
    %1129 = vmatprep.subr.mxu0 0.0
    %1130 = vmatpush1.msra.mxu0 0.0
    %1131 = vmatprep.subr.mxu0 0.0
    %1132 = vmatpush1.msra.mxu0 0.0
    %1133 = vmatprep.subr.mxu0 0.0
    %1134 = vmatpush1.msra.mxu0 0.0
    %1135 = vmatprep.subr.mxu0 0.0
    %1136 = vmatpush1.msra.mxu0 0.0
    %1137 = vmatprep.subr.mxu0 0.0
    %1138 = vmatpush1.msra.mxu0 0.0
    %1139 = vmatprep.subr.mxu0 0.0
    %1140 = vmatpush1.msra.mxu0 0.0
    %1141 = vmatprep.subr.mxu0 0.0
    %1142 = vmatpush1.msra.mxu0 0.0
    %1143 = vmatprep.subr.mxu0 0.0
    %1144 = vmatpush1.msra.mxu0 0.0
    %1145 = vmatprep.subr.mxu0 0.0
    %1146 = vmatpush1.msra.mxu0 0.0
    %1147 = vmatprep.subr.mxu0 0.0
    %1148 = vmatpush1.msra.mxu0 0.0
    %1149 = vmatprep.subr.mxu0 0.0
    %1150 = vmatpush1.msra.mxu0 0.0
    %1151 = vmatprep.subr.mxu0 0.0
    %1152 = vmatpush1.msra.mxu0 0.0
    %1153 = vmatprep.subr.mxu0 0.0
    %1154 = vmatpush1.msra.mxu0 0.0
    %1155 = vmatprep.mubr.f32.mxu0 0.0
    %1156 = vmatmul.mubr.f32.gmra.mrb[0].mxu0 %v1089
    %v1157 = vpop.f32.mrb[0].mxu0
    %v1158 = vadd.f32 0.0, %v1157
    %v1159 = vpop.f32.mrb[0].mxu0
    %1160 = vdwg.mxu0
    %v1161 = vadd.f32 %v387, %v1158
    %v1162 = vxor.u32 %v1161, 2147483648
    %v1163 = vmul.f32 %v1162, 1.442695
    %v1164 = vpow.pop %v1163
    %v1165 = vadd.f32 %v1164, 1.0
    %v1166 = vrcp.pop %v1165
    %v1167 = vmul.f32 1.0, %v1166
    %v1168 = vtanh.pop %v1161
    %v1169 = vmul.f32 %v1167, %v1079
    %1171 = vrot.lane.b32.xlu0 %v1168, 64
    %v1172 = vpop.permute.xlu0 %1171
    %v1174 = vmul.f32 %v1167, %v1172
    %1176 = vrot.lane.b32.xlu0 %v1174, 32
    %v1177 = vpop.permute.xlu0 %1176
    %v1179 = vadd.f32 %v1169, %v1177
    %v1180 = vtanh.pop %v1179
    %1182 = vrot.lane.b32.xlu0 %v1180, 64
    %v1183 = vpop.permute.xlu0 %1182
    %v1185 = vmul.f32 %v1167, %v1183
    %v1186 = vld [vmem:[#allocation7 + $0x21] sm:$0x1]
    %v1187 = vld [vmem:[#allocation7 + $0x22] sm:$0x1]
    %1189 = vrot.lane.b32.xlu0 %v1186, 96
    %v1190 = vpop.permute.xlu0 %1189
    %v1192 = vmul.f32 %v1185, %v1190
    %1194 = vrot.lane.b32.xlu0 %v1192, 32
    %v1195 = vpop.permute.xlu0 %1194
    %vm1197 = vcmask 253952
    %v1198 = vsel %vm1197, %v1195, 0.0
    %1199 = vadd.xlane.f32.xlu0 %v1198
    %v1200 = vpop.xlane.xlu0 %1199
    %v1201 = vadd.f32 %v1200, %v1187
    %vm1202 = vcmask 0
    %1203 = vst.msk [vmem:[#allocation8] sm:$0x1] %vm1202, %v1201
    // Predicated region
    $region26: #{tpu_custom_call.1} parent=1 // pred_check
      _
    $region27: #{tpu_custom_call.1} parent=1 // pred_check_branch
      %1205 = sbr.rel (0) target = $region29
    $region28: #{tpu_custom_call.1} parent=1 // pred_region
      %s1207 = ssub.s32 16, 16
      %1208 = vsyncadd [#allocation4], %s1207
      %s1210 = sshll.u32 [#allocation8], 4
      %s1211 = int_to_ptr.vmem [resolvable:$true] %s1210
      %1213 = dma.vmem_to_hbm [thread:$0]  %s1211, 16, %s3, [#allocation4]
    $region29: #{tpu_custom_call.1} parent=1 // pred_fallthru
      _
    // Predicated region
    $region30: #{tpu_custom_call.1} parent=1 // pred_check
      _
    $region31: #{tpu_custom_call.1} parent=1 // pred_check_branch
      %1215 = sbr.rel (0) target = $region33
    $region32: #{tpu_custom_call.1} parent=1 // pred_region
      %1216 = dma.done [#allocation4], 16
    $region33: #{tpu_custom_call.1} parent=1 // pred_fallthru
      _
    %1217 = vsyncpa [#allocation3], 1
    %1218 = vsyncpa [#allocation6], 1
    %1219 = vsyncpa [#allocation4], 1

</llo_original>
